<compile_context>
chip_gen: v7x
topology: tpu7x:2x2x1
jax: 0.10.0
libtpu: 0.0.40
codegen_flags: <defaults>
</compile_context>

<pallas_src>
import functools

import jax
import jax.numpy as jnp
from jax.experimental import pallas as pl
from jax.experimental.pallas import tpu as pltpu


# ----------------------------------------------------------------------------
# Kernels
# ----------------------------------------------------------------------------
def _fwd_train_kernel(x1_ref, x2_ref, w1_ref, w2_ref, b1_ref, b2_ref, t_ref,
                      o1_ref, o2_ref, ploss_ref, *, batch, bm):
    # Two small lane-dense matmuls (K = D1 / D2), f32 accumulate + f32 bias.
    y1 = jnp.dot(x1_ref[...], w1_ref[...],
                 preferred_element_type=jnp.float32) + b1_ref[...]
    y2 = jnp.dot(x2_ref[...], w2_ref[...],
                 preferred_element_type=jnp.float32) + b2_ref[...]

    o1_ref[...] = y1.astype(o1_ref.dtype)
    o2_ref[...] = y2.astype(o2_ref.dtype)

    # Per-tile squared error, reduced over rows only -> per-lane partial sums.
    diff = y1 + y2 - t_ref[...]
    sq = diff * diff
    if batch % bm != 0:
        # Only the last tile is padded; mask its garbage rows out of the loss.
        row = pl.program_id(0) * bm + jax.lax.broadcasted_iota(jnp.int32, sq.shape, 0)
        sq = jnp.where(row < batch, sq, 0.0)
    # (1, 1, H) lane-partial written per grid step; summed + scaled in the
    # wrapper, so no cross-step accumulator -> batch axis stays "parallel".
    ploss_ref[...] = jnp.sum(sq, axis=0)[None, None, :]


def _fwd_infer_kernel(x1_ref, x2_ref, w1_ref, w2_ref, b1_ref, b2_ref,
                      o1_ref, o2_ref):
    y1 = jnp.dot(x1_ref[...], w1_ref[...],
                 preferred_element_type=jnp.float32) + b1_ref[...]
    y2 = jnp.dot(x2_ref[...], w2_ref[...],
                 preferred_element_type=jnp.float32) + b2_ref[...]
    o1_ref[...] = y1.astype(o1_ref.dtype)
    o2_ref[...] = y2.astype(o2_ref.dtype)


# ----------------------------------------------------------------------------
# Wrapper (mirrors the Model.forward output-dict contract)
# ----------------------------------------------------------------------------
def model_forward(input1, input2, w1, b1, w2, b2, targets=None, *, block_b=2048):
    """Pallas-backed forward. Returns {"output1", "output2"[, "loss"]}.

    block_b: batch rows per grid step. 2048 targets the HBM roofline on
    v5e/v6e; use 4096 on v7x (double the HBM BW, still << 64 MiB VMEM).
    """
    B, D1 = input1.shape
    B2, D2 = input2.shape
    assert B2 == B
    H = w1.shape[1]
    assert w1.shape == (D1, H) and w2.shape == (D2, H)
    assert b1.shape == (H,) and b2.shape == (H,)

    # Batch tile: full batch if small, else a multiple-of-8 tile.
    bm = B if B <= block_b else block_b
    nb = pl.cdiv(B, bm)

    x1_f = input1.astype(jnp.float32)
    x2_f = input2.astype(jnp.float32)
    w1_f = w1.astype(jnp.float32)
    w2_f = w2.astype(jnp.float32)
    b1_2d = b1.reshape(1, H).astype(jnp.float32)
    b2_2d = b2.reshape(1, H).astype(jnp.float32)

    x1_spec = pl.BlockSpec((bm, D1), lambda i: (i, 0))
    x2_spec = pl.BlockSpec((bm, D2), lambda i: (i, 0))
    w1_spec = pl.BlockSpec((D1, H), lambda i: (0, 0))    # resident
    w2_spec = pl.BlockSpec((D2, H), lambda i: (0, 0))    # resident
    b_spec = pl.BlockSpec((1, H), lambda i: (0, 0))      # resident
    y_spec = pl.BlockSpec((bm, H), lambda i: (i, 0))

    if targets is None:
        out1, out2 = pl.pallas_call(
            _fwd_infer_kernel,
            grid=(nb,),
            in_specs=[x1_spec, x2_spec, w1_spec, w2_spec, b_spec, b_spec],
            out_specs=[y_spec, y_spec],
            out_shape=[
                jax.ShapeDtypeStruct((B, H), jnp.float32),
                jax.ShapeDtypeStruct((B, H), jnp.float32),
            ],
            compiler_params=pltpu.CompilerParams(
                dimension_semantics=("parallel",)),
        )(x1_f, x2_f, w1_f, w2_f, b1_2d, b2_2d)
        return {"output1": out1, "output2": out2}

    t_f = targets.astype(jnp.float32)
    t_spec = pl.BlockSpec((bm, H), lambda i: (i, 0))
    # Per-tile lane-partial loss: one (1, 1, H) slab per grid step.
    ploss_spec = pl.BlockSpec((1, 1, H), lambda i: (i, 0, 0))

    out1, out2, ploss = pl.pallas_call(
        functools.partial(_fwd_train_kernel, batch=B, bm=bm),
        grid=(nb,),
        in_specs=[x1_spec, x2_spec, w1_spec, w2_spec, b_spec, b_spec, t_spec],
        out_specs=[y_spec, y_spec, ploss_spec],
        out_shape=[
            jax.ShapeDtypeStruct((B, H), jnp.float32),
            jax.ShapeDtypeStruct((B, H), jnp.float32),
            jax.ShapeDtypeStruct((nb, 1, H), jnp.float32),
        ],
        compiler_params=pltpu.CompilerParams(
            # No cross-step accumulator anymore -> batch axis is parallel
            # (sharded across both TensorCores on v7x; no-op on v5e/v6e).
            dimension_semantics=("parallel",)),
    )(x1_f, x2_f, w1_f, w2_f, b1_2d, b2_2d, t_f)

    loss = jnp.sum(ploss) * (1.0 / float(B * H))
    return {"output1": out1, "output2": out2, "loss": loss}


# ----------------------------------------------------------------------------
# Pure-JAX reference
# ----------------------------------------------------------------------------
def _reference(input1, input2, w1, b1, w2, b2, targets):
    y1 = input1 @ w1 + b1
    y2 = input2 @ w2 + b2
    loss = jnp.mean((y1 + y2 - targets) ** 2)
    return y1, y2, loss


if __name__ == "__main__":
    key = jax.random.PRNGKey(0)
    kx1, kx2, kw1, kw2, kb1, kb2, kt = jax.random.split(key, 7)

    # Small shapes; B=12 with block_b=8 exercises multi-step tiling AND the
    # padded-last-tile loss masking.
    B, D1, D2, H = 12, 32, 32, 128

    x1 = jax.random.normal(kx1, (B, D1), jnp.float32)
    x2 = jax.random.normal(kx2, (B, D2), jnp.float32)
    w1 = jax.random.normal(kw1, (D1, H), jnp.float32) * 0.05
    w2 = jax.random.normal(kw2, (D2, H), jnp.float32) * 0.05
    b1 = jax.random.normal(kb1, (H,), jnp.float32) * 0.01
    b2 = jax.random.normal(kb2, (H,), jnp.float32) * 0.01
    targets = jax.random.normal(kt, (B, H), jnp.float32)

    ref1, ref2, ref_loss = _reference(x1, x2, w1, b1, w2, b2, targets)

    # Training path (with targets -> loss).
    out = model_forward(x1, x2, w1, b1, w2, b2, targets, block_b=8)
    jax.block_until_ready(out)
    assert jnp.allclose(out["output1"], ref1, atol=1e-3, rtol=1e-3)
    assert jnp.allclose(out["output2"], ref2, atol=1e-3, rtol=1e-3)
    assert jnp.allclose(out["loss"], ref_loss, atol=1e-3, rtol=1e-3)

    # Inference path (no targets -> no loss key, loss-free kernel variant).
    out_inf = model_forward(x1, x2, w1, b1, w2, b2, None, block_b=8)
    jax.block_until_ready(out_inf)
    assert "loss" not in out_inf
    assert jnp.allclose(out_inf["output1"], ref1, atol=1e-3, rtol=1e-3)
    assert jnp.allclose(out_inf["output2"], ref2, atol=1e-3, rtol=1e-3)

    print("KERNEL_OK")
</pallas_src>

<mosaic_0001>
module attributes {stable_mosaic.version = 11 : i64} {
  func.func @_fwd_train_kernel(%arg0: i32, %arg1: memref<8x32xf32, #tpu.memory_space<vmem>>, %arg2: memref<8x32xf32, #tpu.memory_space<vmem>>, %arg3: memref<32x128xf32, #tpu.memory_space<vmem>>, %arg4: memref<32x128xf32, #tpu.memory_space<vmem>>, %arg5: memref<1x128xf32, #tpu.memory_space<vmem>>, %arg6: memref<1x128xf32, #tpu.memory_space<vmem>>, %arg7: memref<8x128xf32, #tpu.memory_space<vmem>>, %arg8: memref<8x128xf32, #tpu.memory_space<vmem>>, %arg9: memref<8x128xf32, #tpu.memory_space<vmem>>, %arg10: memref<1x1x128xf32, #tpu.memory_space<vmem>>) attributes {dimension_semantics = [#tpu.dimension_semantics<parallel>], iteration_bounds = array<i64: 2>, scalar_prefetch = 0 : i64, scratch_operands = 0 : i64, tpu.core_type = #tpu.core_type<tc>, window_params = [{transform_indices = @transform_0, window_bounds = array<i64: 8, 32>}, {transform_indices = @transform_1, window_bounds = array<i64: 8, 32>}, {pipeline_mode = #tpu.pipeline_mode<synchronous>, transform_indices = @transform_2, window_bounds = array<i64: 32, 128>}, {pipeline_mode = #tpu.pipeline_mode<synchronous>, transform_indices = @transform_3, window_bounds = array<i64: 32, 128>}, {pipeline_mode = #tpu.pipeline_mode<synchronous>, transform_indices = @transform_4, window_bounds = array<i64: 1, 128>}, {pipeline_mode = #tpu.pipeline_mode<synchronous>, transform_indices = @transform_5, window_bounds = array<i64: 1, 128>}, {transform_indices = @transform_6, window_bounds = array<i64: 8, 128>}, {transform_indices = @transform_7, window_bounds = array<i64: 8, 128>}, {transform_indices = @transform_8, window_bounds = array<i64: 8, 128>}, {transform_indices = @transform_9, window_bounds = array<i64: 1, 1, 128>}]} {
    %c0 = arith.constant 0 : index
    %c0_0 = arith.constant 0 : index
    %0 = vector.load %arg1[%c0, %c0_0] : memref<8x32xf32, #tpu.memory_space<vmem>>, vector<8x32xf32>
    %c0_1 = arith.constant 0 : index
    %c0_2 = arith.constant 0 : index
    %1 = vector.load %arg3[%c0_1, %c0_2] : memref<32x128xf32, #tpu.memory_space<vmem>>, vector<32x128xf32>
    %cst = arith.constant dense<0.000000e+00> : vector<8x128xf32>
    %2 = tpu.matmul %0, %1, %cst {dimension_numbers = #tpu.dot_dimension_numbers<[1], [0], [0], [1], [0, 0, 1, 1], [], []>} : vector<8x32xf32>, vector<32x128xf32>, vector<8x128xf32> -> vector<8x128xf32>
    %c0_3 = arith.constant 0 : index
    %c0_4 = arith.constant 0 : index
    %3 = vector.load %arg5[%c0_3, %c0_4] : memref<1x128xf32, #tpu.memory_space<vmem>>, vector<1x128xf32>
    %4 = vector.broadcast %3 : vector<1x128xf32> to vector<8x128xf32>
    %5 = arith.addf %2, %4 : vector<8x128xf32>
    %c0_5 = arith.constant 0 : index
    %c0_6 = arith.constant 0 : index
    %6 = vector.load %arg2[%c0_5, %c0_6] : memref<8x32xf32, #tpu.memory_space<vmem>>, vector<8x32xf32>
    %c0_7 = arith.constant 0 : index
    %c0_8 = arith.constant 0 : index
    %7 = vector.load %arg4[%c0_7, %c0_8] : memref<32x128xf32, #tpu.memory_space<vmem>>, vector<32x128xf32>
    %cst_9 = arith.constant dense<0.000000e+00> : vector<8x128xf32>
    %8 = tpu.matmul %6, %7, %cst_9 {dimension_numbers = #tpu.dot_dimension_numbers<[1], [0], [0], [1], [0, 0, 1, 1], [], []>} : vector<8x32xf32>, vector<32x128xf32>, vector<8x128xf32> -> vector<8x128xf32>
    %c0_10 = arith.constant 0 : index
    %c0_11 = arith.constant 0 : index
    %9 = vector.load %arg6[%c0_10, %c0_11] : memref<1x128xf32, #tpu.memory_space<vmem>>, vector<1x128xf32>
    %10 = vector.broadcast %9 : vector<1x128xf32> to vector<8x128xf32>
    %11 = arith.addf %8, %10 : vector<8x128xf32>
    %c0_12 = arith.constant 0 : index
    %c0_13 = arith.constant 0 : index
    %12 = vector.load %arg8[%c0_12, %c0_13] : memref<8x128xf32, #tpu.memory_space<vmem>>, vector<8x128xf32>
    tpu.vector_store %arg8[%c0_12, %c0_13], %5 {strides = array<i32>} : memref<8x128xf32, #tpu.memory_space<vmem>>, vector<8x128xf32>,
    %c0_14 = arith.constant 0 : index
    %c0_15 = arith.constant 0 : index
    %13 = vector.load %arg9[%c0_14, %c0_15] : memref<8x128xf32, #tpu.memory_space<vmem>>, vector<8x128xf32>
    tpu.vector_store %arg9[%c0_14, %c0_15], %11 {strides = array<i32>} : memref<8x128xf32, #tpu.memory_space<vmem>>, vector<8x128xf32>,
    %14 = arith.addf %5, %11 : vector<8x128xf32>
    %c0_16 = arith.constant 0 : index
    %c0_17 = arith.constant 0 : index
    %15 = vector.load %arg7[%c0_16, %c0_17] : memref<8x128xf32, #tpu.memory_space<vmem>>, vector<8x128xf32>
    %16 = arith.subf %14, %15 : vector<8x128xf32>
    %17 = arith.mulf %16, %16 : vector<8x128xf32>
    %c8_i32 = arith.constant 8 : i32
    %18 = arith.muli %arg0, %c8_i32 : i32
    %19 = tpu.iota {dimensions = array<i32: 0>} : vector<8x128xi32>
    %20 = vector.broadcast %18 : i32 to vector<8x128xi32>
    %21 = arith.addi %20, %19 : vector<8x128xi32>
    %c12_i32 = arith.constant 12 : i32
    %22 = vector.broadcast %c12_i32 : i32 to vector<8x128xi32>
    %23 = arith.cmpi slt, %21, %22 : vector<8x128xi32>
    %cst_18 = arith.constant 0.000000e+00 : f32
    %24 = vector.broadcast %cst_18 : f32 to vector<8x128xf32>
    %25 = arith.select %23, %17, %24 : vector<8x128xi1>, vector<8x128xf32>
    %cst_19 = arith.constant dense<0.000000e+00> : vector<128xf32>
    %26 = vector.multi_reduction <add>, %25, %cst_19 [0] : vector<8x128xf32> to vector<128xf32>
    %27 = vector.shape_cast %26 : vector<128xf32> to vector<1x1x128xf32>
    %c0_20 = arith.constant 0 : index
    %c0_21 = arith.constant 0 : index
    %c0_22 = arith.constant 0 : index
    %28 = vector.load %arg10[%c0_20, %c0_21, %c0_22] : memref<1x1x128xf32, #tpu.memory_space<vmem>>, vector<1x1x128xf32>
    tpu.vector_store %arg10[%c0_20, %c0_21, %c0_22], %27 {strides = array<i32>} : memref<1x1x128xf32, #tpu.memory_space<vmem>>, vector<1x1x128xf32>,
    return
  }
  func.func @transform_0(%arg0: i32) -> (i32, i32) {
    %c0_i32 = arith.constant 0 : i32
    %c0_i32_0 = arith.constant 0 : i32
    return %arg0, %c0_i32 : i32, i32
  }
  func.func @transform_1(%arg0: i32) -> (i32, i32) {
    %c0_i32 = arith.constant 0 : i32
    %c0_i32_0 = arith.constant 0 : i32
    return %arg0, %c0_i32 : i32, i32
  }
  func.func @transform_2(%arg0: i32) -> (i32, i32) {
    %c0_i32 = arith.constant 0 : i32
    %c0_i32_0 = arith.constant 0 : i32
    %c0_i32_1 = arith.constant 0 : i32
    return %c0_i32, %c0_i32_0 : i32, i32
  }
  func.func @transform_3(%arg0: i32) -> (i32, i32) {
    %c0_i32 = arith.constant 0 : i32
    %c0_i32_0 = arith.constant 0 : i32
    %c0_i32_1 = arith.constant 0 : i32
    return %c0_i32, %c0_i32_0 : i32, i32
  }
  func.func @transform_4(%arg0: i32) -> (i32, i32) {
    %c0_i32 = arith.constant 0 : i32
    %c0_i32_0 = arith.constant 0 : i32
    %c0_i32_1 = arith.constant 0 : i32
    return %c0_i32, %c0_i32_0 : i32, i32
  }
  func.func @transform_5(%arg0: i32) -> (i32, i32) {
    %c0_i32 = arith.constant 0 : i32
    %c0_i32_0 = arith.constant 0 : i32
    %c0_i32_1 = arith.constant 0 : i32
    return %c0_i32, %c0_i32_0 : i32, i32
  }
  func.func @transform_6(%arg0: i32) -> (i32, i32) {
    %c0_i32 = arith.constant 0 : i32
    %c0_i32_0 = arith.constant 0 : i32
    return %arg0, %c0_i32 : i32, i32
  }
  func.func @transform_7(%arg0: i32) -> (i32, i32) {
    %c0_i32 = arith.constant 0 : i32
    %c0_i32_0 = arith.constant 0 : i32
    return %arg0, %c0_i32 : i32, i32
  }
  func.func @transform_8(%arg0: i32) -> (i32, i32) {
    %c0_i32 = arith.constant 0 : i32
    %c0_i32_0 = arith.constant 0 : i32
    return %arg0, %c0_i32 : i32, i32
  }
  func.func @transform_9(%arg0: i32) -> (i32, i32, i32) {
    %c0_i32 = arith.constant 0 : i32
    %c0_i32_0 = arith.constant 0 : i32
    %c0_i32_1 = arith.constant 0 : i32
    return %arg0, %c0_i32, %c0_i32_0 : i32, i32, i32
  }
}

</mosaic_0001>

<llo_original>
// kernel: tpu_custom_call.1
$region0: #{tpu_custom_call.1}
  #allocation0 [shape = 'u32[]', space=smem, size = 0x4, offset = 0x4, fixed_abs, tag = 'smem constant byte address 0x4 - core index']
  #allocation1 [shape = 'u32[144,128]{1,0:T(1,128)}', space=vmem, size = 0x12000, scoped, tag = 'internal scratch']
  %s0 = inlined_call_operand.hbm [shape: f32[12,32], index: 0, kind: input, shape index: {}]
  %s1 = inlined_call_operand.hbm [shape: f32[12,32], index: 1, kind: input, shape index: {}]
  %s2 = inlined_call_operand.hbm [shape: f32[32,128], index: 2, kind: input, shape index: {}]
  %s3 = inlined_call_operand.hbm [shape: f32[32,128], index: 3, kind: input, shape index: {}]
  %s4 = inlined_call_operand.vmem [shape: f32[1,128], index: 4, kind: input, shape index: {}]
  %s5 = inlined_call_operand.vmem [shape: f32[1,128], index: 5, kind: input, shape index: {}]
  %s6 = inlined_call_operand.vmem [shape: f32[12,128], index: 6, kind: input, shape index: {}]
  %s7 = inlined_call_operand.hbm [shape: f32[12,128], index: 7, kind: output, shape index: {0}]
  %s8 = inlined_call_operand.hbm [shape: f32[12,128], index: 8, kind: output, shape index: {1}]
  %s9 = inlined_call_operand.hbm [shape: f32[2,1,128], index: 9, kind: output, shape index: {2}]
  %10 = xla_tuple %s7, %s8, %s9
  %s11 = sld [smem:[#allocation0]]
  $region93: #{tpu_custom_call.1} parent=0
    _
  %s13 = ssub.s32 1, %s11
  %s14 = scalar_select 0, %s13, %s11
  $region1: #{tpu_custom_call.1} parent=0
    #allocation2 [shape = 'u8[8192]{0}', space=vmem, size = 0x2000, scoped, tag = 'input window, operand 0']
    #allocation3 [shape = 's32[2]{0}', space=sflag, size = 0x8, scoped, tag = 'scoped memory for tpu_custom_call.1']
    #allocation4 [shape = 's32[2]{0}', space=sflag, size = 0x8, scoped, tag = 'scoped memory for tpu_custom_call.1']
    #allocation5 [shape = 'u8[8192]{0}', space=vmem, size = 0x2000, scoped, tag = 'input window, operand 1']
    #allocation6 [shape = 's32[2]{0}', space=sflag, size = 0x8, scoped, tag = 'scoped memory for tpu_custom_call.1']
    #allocation7 [shape = 'u8[16384]{0}', space=vmem, size = 0x4000, scoped, tag = 'input window, operand 2, single buffered']
    #allocation8 [shape = 'u8[16384]{0}', space=vmem, size = 0x4000, scoped, tag = 'input window, operand 3, single buffered']
    #allocation9 [shape = 's32[1]{0}', space=sflag, size = 0x4, scoped, tag = 'scoped memory for tpu_custom_call.1']
    #allocation10 [shape = 'u8[8192]{0}', space=vmem, size = 0x2000, scoped, tag = 'output window, operand 0']
    #allocation11 [shape = 'u8[8192]{0}', space=vmem, size = 0x2000, scoped, tag = 'output window, operand 1']
    #allocation12 [shape = 's32[2]{0}', space=sflag, size = 0x8, scoped, tag = 'scoped memory for tpu_custom_call.1']
    #allocation13 [shape = 'u8[1024]{0}', space=vmem, size = 0x400, scoped, tag = 'output window, operand 2']
    %15 = vsyncpa [#allocation3], 0
    %s16 = scalar_lea.sflag [#allocation3], 1
    %17 = vsyncpa %s16, 0
    %18 = vsyncpa [#allocation6], 0
    %s19 = scalar_lea.sflag [#allocation6], 1
    %20 = vsyncpa %s19, 0
    %21 = vsyncpa [#allocation9], 0
    %22 = vsyncpa [#allocation4], 0
    %s23 = scalar_lea.sflag [#allocation4], 1
    %24 = vsyncpa %s23, 0
    %25 = vsyncpa [#allocation12], 0
    %s26 = scalar_lea.sflag [#allocation12], 1
    %27 = vsyncpa %s26, 0
    loop: start=0, step=1, limit=4
    $region2: #{tpu_custom_call.1} parent=1 // loop_pre_header
      _
    $region3: #{tpu_custom_call.1} parent=1 // loop_header
      %s29 = sphi 0, %s33
      %p30 = scmp.ge.s32.totalorder %s29, 4
      %s39 = sphi 0, %s41
      %s42 = sphi 0, %s39
      %s43 = sphi 0, %s42
      %s59 = sphi 0, %s43
      %s65 = sphi 0, %s67
      %s68 = sphi 0, %s65
      %s69 = sphi 0, %s68
      %s85 = sphi 0, %s69
      %s89 = sphi 0, %s89
      %s91 = sphi 0, %s89
      %s92 = sphi 0, %s91
      %s106 = sphi 0, %s92
      %s110 = sphi 0, %s110
      %s112 = sphi 0, %s110
      %s113 = sphi 0, %s112
      %s127 = sphi 0, %s113
      %s131 = sphi 0, %s131
      %s133 = sphi 0, %s131
      %s134 = sphi 0, %s133
      %s148 = sphi 0, %s134
      %s152 = sphi 0, %s152
      %s154 = sphi 0, %s152
      %s155 = sphi 0, %s154
      %s169 = sphi 0, %s155
      %s175 = sphi 0, %s177
      %s178 = sphi 0, %s175
      %s179 = sphi 0, %s178
      %s195 = sphi 0, %s179
      %s201 = sphi 0, %s203
      %s204 = sphi 0, %s201
      %s205 = sphi 0, %s204
      %s221 = sphi 0, %s205
      %s227 = sphi 0, %s229
      %s230 = sphi 0, %s227
      %s231 = sphi 0, %s230
      %s247 = sphi 0, %s231
      %s253 = sphi 0, %s255
      %s256 = sphi 0, %s253
      %s257 = sphi 0, %s256
      %s273 = sphi 0, %s257
    $region4: #{tpu_custom_call.1} parent=1 // loop_header_branch
      %32 = sbr.rel (%p30) target = $region8
    $region5: #{tpu_custom_call.1} parent=1 // loop_body
      %s34 = ssub.s32 %s29, 1
      %s35 = ssub.s32 %s29, 2
      %s36 = sadd.s32 %s29, 1
      %s37 = ssub.s32 %s29, %s36
      %p38 = scmp.eq.s32.totalorder %s37, 0
      %s40 = sadd.s32 %s39, 1
      %s41 = scalar_select %p38, %s39, %s40
      %p44 = pneg %p38
      %p45 = scmp.eq.s32.totalorder %s29, 1
      %p46 = por %p44, %p45
      %p47 = scmp.ne.s32.totalorder %s39, %s42
      %p48 = scmp.eq.s32.totalorder %s29, 0
      %p49 = por %p47, %p48
      %p50 = scmp.ne.s32.totalorder %s39, %s42
      %p51 = scmp.eq.s32.totalorder %s34, 1
      %p52 = por %p50, %p51
      %p53 = scmp.ne.s32.totalorder %s42, %s43
      %p54 = scmp.eq.s32.totalorder %s34, 0
      %p55 = por %p53, %p54
      %p56 = scmp.ne.s32.totalorder %s42, %s43
      %p57 = scmp.eq.s32.totalorder %s35, 1
      %p58 = por %p56, %p57
      %p60 = scmp.ne.s32.totalorder %s43, %s59
      %p61 = scmp.eq.s32.totalorder %s35, 0
      %p62 = por %p60, %p61
      %s63 = ssub.s32 %s29, %s36
      %p64 = scmp.eq.s32.totalorder %s63, 0
      %s66 = sadd.s32 %s65, 1
      %s67 = scalar_select %p64, %s65, %s66
      %p70 = pneg %p64
      %p71 = scmp.eq.s32.totalorder %s29, 1
      %p72 = por %p70, %p71
      %p73 = scmp.ne.s32.totalorder %s65, %s68
      %p74 = scmp.eq.s32.totalorder %s29, 0
      %p75 = por %p73, %p74
      %p76 = scmp.ne.s32.totalorder %s65, %s68
      %p77 = scmp.eq.s32.totalorder %s34, 1
      %p78 = por %p76, %p77
      %p79 = scmp.ne.s32.totalorder %s68, %s69
      %p80 = scmp.eq.s32.totalorder %s34, 0
      %p81 = por %p79, %p80
      %p82 = scmp.ne.s32.totalorder %s68, %s69
      %p83 = scmp.eq.s32.totalorder %s35, 1
      %p84 = por %p82, %p83
      %p86 = scmp.ne.s32.totalorder %s69, %s85
      %p87 = scmp.eq.s32.totalorder %s35, 0
      %p88 = por %p86, %p87
      %s90 = sadd.s32 %s89, 1
      %p93 = scmp.eq.s32.totalorder %s29, 1
      %p94 = scmp.ne.s32.totalorder %s89, %s91
      %p95 = scmp.eq.s32.totalorder %s29, 0
      %p96 = por %p94, %p95
      %p97 = scmp.ne.s32.totalorder %s89, %s91
      %p98 = scmp.eq.s32.totalorder %s34, 1
      %p99 = por %p97, %p98
      %p100 = scmp.ne.s32.totalorder %s91, %s92
      %p101 = scmp.eq.s32.totalorder %s34, 0
      %p102 = por %p100, %p101
      %p103 = scmp.ne.s32.totalorder %s91, %s92
      %p104 = scmp.eq.s32.totalorder %s35, 1
      %p105 = por %p103, %p104
      %p107 = scmp.ne.s32.totalorder %s92, %s106
      %p108 = scmp.eq.s32.totalorder %s35, 0
      %p109 = por %p107, %p108
      %s111 = sadd.s32 %s110, 1
      %p114 = scmp.eq.s32.totalorder %s29, 1
      %p115 = scmp.ne.s32.totalorder %s110, %s112
      %p116 = scmp.eq.s32.totalorder %s29, 0
      %p117 = por %p115, %p116
      %p118 = scmp.ne.s32.totalorder %s110, %s112
      %p119 = scmp.eq.s32.totalorder %s34, 1
      %p120 = por %p118, %p119
      %p121 = scmp.ne.s32.totalorder %s112, %s113
      %p122 = scmp.eq.s32.totalorder %s34, 0
      %p123 = por %p121, %p122
      %p124 = scmp.ne.s32.totalorder %s112, %s113
      %p125 = scmp.eq.s32.totalorder %s35, 1
      %p126 = por %p124, %p125
      %p128 = scmp.ne.s32.totalorder %s113, %s127
      %p129 = scmp.eq.s32.totalorder %s35, 0
      %p130 = por %p128, %p129
      %s132 = sadd.s32 %s131, 1
      %p135 = scmp.eq.s32.totalorder %s29, 1
      %p136 = scmp.ne.s32.totalorder %s131, %s133
      %p137 = scmp.eq.s32.totalorder %s29, 0
      %p138 = por %p136, %p137
      %p139 = scmp.ne.s32.totalorder %s131, %s133
      %p140 = scmp.eq.s32.totalorder %s34, 1
      %p141 = por %p139, %p140
      %p142 = scmp.ne.s32.totalorder %s133, %s134
      %p143 = scmp.eq.s32.totalorder %s34, 0
      %p144 = por %p142, %p143
      %p145 = scmp.ne.s32.totalorder %s133, %s134
      %p146 = scmp.eq.s32.totalorder %s35, 1
      %p147 = por %p145, %p146
      %p149 = scmp.ne.s32.totalorder %s134, %s148
      %p150 = scmp.eq.s32.totalorder %s35, 0
      %p151 = por %p149, %p150
      %s153 = sadd.s32 %s152, 1
      %p156 = scmp.eq.s32.totalorder %s29, 1
      %p157 = scmp.ne.s32.totalorder %s152, %s154
      %p158 = scmp.eq.s32.totalorder %s29, 0
      %p159 = por %p157, %p158
      %p160 = scmp.ne.s32.totalorder %s152, %s154
      %p161 = scmp.eq.s32.totalorder %s34, 1
      %p162 = por %p160, %p161
      %p163 = scmp.ne.s32.totalorder %s154, %s155
      %p164 = scmp.eq.s32.totalorder %s34, 0
      %p165 = por %p163, %p164
      %p166 = scmp.ne.s32.totalorder %s154, %s155
      %p167 = scmp.eq.s32.totalorder %s35, 1
      %p168 = por %p166, %p167
      %p170 = scmp.ne.s32.totalorder %s155, %s169
      %p171 = scmp.eq.s32.totalorder %s35, 0
      %p172 = por %p170, %p171
      %s173 = ssub.s32 %s29, %s36
      %p174 = scmp.eq.s32.totalorder %s173, 0
      %s176 = sadd.s32 %s175, 1
      %s177 = scalar_select %p174, %s175, %s176
      %p180 = pneg %p174
      %p181 = scmp.eq.s32.totalorder %s29, 1
      %p182 = por %p180, %p181
      %p183 = scmp.ne.s32.totalorder %s175, %s178
      %p184 = scmp.eq.s32.totalorder %s29, 0
      %p185 = por %p183, %p184
      %p186 = scmp.ne.s32.totalorder %s175, %s178
      %p187 = scmp.eq.s32.totalorder %s34, 1
      %p188 = por %p186, %p187
      %p189 = scmp.ne.s32.totalorder %s178, %s179
      %p190 = scmp.eq.s32.totalorder %s34, 0
      %p191 = por %p189, %p190
      %p192 = scmp.ne.s32.totalorder %s178, %s179
      %p193 = scmp.eq.s32.totalorder %s35, 1
      %p194 = por %p192, %p193
      %p196 = scmp.ne.s32.totalorder %s179, %s195
      %p197 = scmp.eq.s32.totalorder %s35, 0
      %p198 = por %p196, %p197
      %s199 = ssub.s32 %s29, %s36
      %p200 = scmp.eq.s32.totalorder %s199, 0
      %s202 = sadd.s32 %s201, 1
      %s203 = scalar_select %p200, %s201, %s202
      %p206 = pneg %p200
      %p207 = scmp.eq.s32.totalorder %s29, 1
      %p208 = por %p206, %p207
      %p209 = scmp.ne.s32.totalorder %s201, %s204
      %p210 = scmp.eq.s32.totalorder %s29, 0
      %p211 = por %p209, %p210
      %p212 = scmp.ne.s32.totalorder %s201, %s204
      %p213 = scmp.eq.s32.totalorder %s34, 1
      %p214 = por %p212, %p213
      %p215 = scmp.ne.s32.totalorder %s204, %s205
      %p216 = scmp.eq.s32.totalorder %s34, 0
      %p217 = por %p215, %p216
      %p218 = scmp.ne.s32.totalorder %s204, %s205
      %p219 = scmp.eq.s32.totalorder %s35, 1
      %p220 = por %p218, %p219
      %p222 = scmp.ne.s32.totalorder %s205, %s221
      %p223 = scmp.eq.s32.totalorder %s35, 0
      %p224 = por %p222, %p223
      %s225 = ssub.s32 %s29, %s36
      %p226 = scmp.eq.s32.totalorder %s225, 0
      %s228 = sadd.s32 %s227, 1
      %s229 = scalar_select %p226, %s227, %s228
      %p232 = pneg %p226
      %p233 = scmp.eq.s32.totalorder %s29, 1
      %p234 = por %p232, %p233
      %p235 = scmp.ne.s32.totalorder %s227, %s230
      %p236 = scmp.eq.s32.totalorder %s29, 0
      %p237 = por %p235, %p236
      %p238 = scmp.ne.s32.totalorder %s227, %s230
      %p239 = scmp.eq.s32.totalorder %s34, 1
      %p240 = por %p238, %p239
      %p241 = scmp.ne.s32.totalorder %s230, %s231
      %p242 = scmp.eq.s32.totalorder %s34, 0
      %p243 = por %p241, %p242
      %p244 = scmp.ne.s32.totalorder %s230, %s231
      %p245 = scmp.eq.s32.totalorder %s35, 1
      %p246 = por %p244, %p245
      %p248 = scmp.ne.s32.totalorder %s231, %s247
      %p249 = scmp.eq.s32.totalorder %s35, 0
      %p250 = por %p248, %p249
      %s251 = ssub.s32 %s29, %s36
      %p252 = scmp.eq.s32.totalorder %s251, 0
      %s254 = sadd.s32 %s253, 1
      %s255 = scalar_select %p252, %s253, %s254
      %p258 = pneg %p252
      %p259 = scmp.eq.s32.totalorder %s29, 1
      %p260 = por %p258, %p259
      %p261 = scmp.ne.s32.totalorder %s253, %s256
      %p262 = scmp.eq.s32.totalorder %s29, 0
      %p263 = por %p261, %p262
      %p264 = scmp.ne.s32.totalorder %s253, %s256
      %p265 = scmp.eq.s32.totalorder %s34, 1
      %p266 = por %p264, %p265
      %p267 = scmp.ne.s32.totalorder %s256, %s257
      %p268 = scmp.eq.s32.totalorder %s34, 0
      %p269 = por %p267, %p268
      %p270 = scmp.ne.s32.totalorder %s256, %s257
      %p271 = scmp.eq.s32.totalorder %s35, 1
      %p272 = por %p270, %p271
      %p274 = scmp.ne.s32.totalorder %s257, %s273
      %p275 = scmp.eq.s32.totalorder %s35, 0
      %p276 = por %p274, %p275
      %p277 = scmp.le.s32.totalorder 1, %s29
      %p278 = scmp.lt.s32.totalorder %s29, 3
      %p279 = pnand %p277, %p278
      %p280 = pneg %p279
      // Predicated region
      $region9: #{tpu_custom_call.1} parent=5 // pred_check
        _
      $region10: #{tpu_custom_call.1} parent=5 // pred_check_branch
        %282 = sbr.rel (%p279) target = $region12
      $region11: #{tpu_custom_call.1} parent=5 // pred_region
        %s283 = ssub.s32 %s29, 1
        // Predicated region
        $region13: #{tpu_custom_call.1} parent=11 // pred_check
          %p284 = pneg %p102
        $region14: #{tpu_custom_call.1} parent=11 // pred_check_branch
          %286 = sbr.rel (%p284) target = $region16
        $region15: #{tpu_custom_call.1} parent=11 // pred_region
          %s288 = ssub.s32 512, 512
          %289 = vsyncadd [#allocation6], %s288
          %s290 = sshll.u32 [#allocation7], 4
          %s291 = int_to_ptr.vmem [resolvable:$true] %s290
          %296 = dma.hbm_to_vmem [thread:$0]  %s2, 512, %s291, [#allocation6], 128, 128, 8
        $region16: #{tpu_custom_call.1} parent=11 // pred_fallthru
          _
        // Predicated region
        $region17: #{tpu_custom_call.1} parent=11 // pred_check
          %p297 = pneg %p123
        $region18: #{tpu_custom_call.1} parent=11 // pred_check_branch
          %299 = sbr.rel (%p297) target = $region20
        $region19: #{tpu_custom_call.1} parent=11 // pred_region
          %s301 = ssub.s32 512, 512
          %302 = vsyncadd [#allocation9], %s301
          %s303 = sshll.u32 [#allocation8], 4
          %s304 = int_to_ptr.vmem [resolvable:$true] %s303
          %309 = dma.hbm_to_vmem [thread:$0]  %s3, 512, %s304, [#allocation9], 128, 128, 8
        $region20: #{tpu_custom_call.1} parent=11 // pred_fallthru
          _
        // Predicated region
        $region21: #{tpu_custom_call.1} parent=11 // pred_check
          %p310 = pneg %p144
        $region22: #{tpu_custom_call.1} parent=11 // pred_check_branch
          %312 = sbr.rel (%p310) target = $region24
        $region23: #{tpu_custom_call.1} parent=11 // pred_region
          _
        $region24: #{tpu_custom_call.1} parent=11 // pred_fallthru
          _
        // Predicated region
        $region25: #{tpu_custom_call.1} parent=11 // pred_check
          %p313 = pneg %p165
        $region26: #{tpu_custom_call.1} parent=11 // pred_check_branch
          %315 = sbr.rel (%p313) target = $region28
        $region27: #{tpu_custom_call.1} parent=11 // pred_region
          _
        $region28: #{tpu_custom_call.1} parent=11 // pred_fallthru
          _
      $region12: #{tpu_custom_call.1} parent=5 // pred_fallthru
        _
      %p316 = scmp.lt.s32.totalorder %s29, 2
      // Predicated region
      $region29: #{tpu_custom_call.1} parent=5 // pred_check
        %p317 = pneg %p316
      $region30: #{tpu_custom_call.1} parent=5 // pred_check_branch
        %319 = sbr.rel (%p317) target = $region32
      $region31: #{tpu_custom_call.1} parent=5 // pred_region
        // Predicated region
        $region33: #{tpu_custom_call.1} parent=31 // pred_check
          %p320 = pneg %p49
        $region34: #{tpu_custom_call.1} parent=31 // pred_check_branch
          %322 = sbr.rel (%p320) target = $region36
        $region35: #{tpu_custom_call.1} parent=31 // pred_region
          %s323 = sand.u32 %s39, 1
          %s324 = scalar_lea.sflag [#allocation3], %s323
          %s325 = sand.u32 %s39, 1
          %s326 = smul.addr %s325, 8
          %s327 = scalar_lea.vmem [#allocation2], %s326
          %s329 = ssub.s32 128, 128
          %330 = vsyncadd %s324, %s329
          %s331 = smul.addr %s29, 128
          %s332 = scalar_lea.hbm %s0, %s331
          %s334 = sshll.u32 %s327, 4
          %s335 = int_to_ptr.vmem [resolvable:$true] %s334
          %337 = dma.hbm_to_vmem [thread:$0]  %s332, 128, %s335, %s324
        $region36: #{tpu_custom_call.1} parent=31 // pred_fallthru
          _
        // Predicated region
        $region37: #{tpu_custom_call.1} parent=31 // pred_check
          %p338 = pneg %p75
        $region38: #{tpu_custom_call.1} parent=31 // pred_check_branch
          %340 = sbr.rel (%p338) target = $region40
        $region39: #{tpu_custom_call.1} parent=31 // pred_region
          %s341 = sand.u32 %s29, 1
          %s342 = scalar_lea.sflag [#allocation6], %s341
          %s343 = sand.u32 %s65, 1
          %s344 = smul.addr %s343, 8
          %s345 = scalar_lea.vmem [#allocation5], %s344
          %s347 = ssub.s32 128, 128
          %348 = vsyncadd %s342, %s347
          %s349 = smul.addr %s29, 128
          %s350 = scalar_lea.hbm %s1, %s349
          %s352 = sshll.u32 %s345, 4
          %s353 = int_to_ptr.vmem [resolvable:$true] %s352
          %355 = dma.hbm_to_vmem [thread:$0]  %s350, 128, %s353, %s342
        $region40: #{tpu_custom_call.1} parent=31 // pred_fallthru
          _
        // Predicated region
        $region41: #{tpu_custom_call.1} parent=31 // pred_check
          %p356 = pneg %p185
        $region42: #{tpu_custom_call.1} parent=31 // pred_check_branch
          %358 = sbr.rel (%p356) target = $region44
        $region43: #{tpu_custom_call.1} parent=31 // pred_region
          %p359 = scmp.lt.s32.totalorder %s29, 1
          %s360 = scalar_select %p359, %s29, 1
          %s361 = smul.addr %s360, 8
          %s362 = scalar_lea.vmem %s6, %s361
        $region44: #{tpu_custom_call.1} parent=31 // pred_fallthru
          _
      $region32: #{tpu_custom_call.1} parent=5 // pred_fallthru
        _
      %p363 = scmp.le.s32.totalorder 1, %s29
      %p364 = scmp.lt.s32.totalorder %s29, 3
      %p365 = pnand %p363, %p364
      %p366 = pneg %p365
      // Predicated region
      $region45: #{tpu_custom_call.1} parent=5 // pred_check
        _
      $region46: #{tpu_custom_call.1} parent=5 // pred_check_branch
        %368 = sbr.rel (%p365) target = $region48
      $region47: #{tpu_custom_call.1} parent=5 // pred_region
        %s369 = ssub.s32 %s29, 1
        %s370 = sand.u32 %s42, 1
        %s371 = scalar_lea.sflag [#allocation3], %s370
        %s372 = sand.u32 %s42, 1
        %s373 = smul.addr %s372, 8
        %s374 = scalar_lea.vmem [#allocation2], %s373
        // Predicated region
        $region49: #{tpu_custom_call.1} parent=47 // pred_check
          %p375 = pneg %p55
        $region50: #{tpu_custom_call.1} parent=47 // pred_check_branch
          %377 = sbr.rel (%p375) target = $region52
        $region51: #{tpu_custom_call.1} parent=47 // pred_region
          %378 = dma.done %s371, 128
        $region52: #{tpu_custom_call.1} parent=47 // pred_fallthru
          _
        %s379 = sand.u32 %s34, 1
        %s380 = scalar_lea.sflag [#allocation6], %s379
        %s381 = sand.u32 %s68, 1
        %s382 = smul.addr %s381, 8
        %s383 = scalar_lea.vmem [#allocation5], %s382
        // Predicated region
        $region53: #{tpu_custom_call.1} parent=47 // pred_check
          %p384 = pneg %p81
        $region54: #{tpu_custom_call.1} parent=47 // pred_check_branch
          %386 = sbr.rel (%p384) target = $region56
        $region55: #{tpu_custom_call.1} parent=47 // pred_region
          %387 = dma.done %s380, 128
        $region56: #{tpu_custom_call.1} parent=47 // pred_fallthru
          _
        // Predicated region
        $region57: #{tpu_custom_call.1} parent=47 // pred_check
          %p388 = pneg %p102
        $region58: #{tpu_custom_call.1} parent=47 // pred_check_branch
          %390 = sbr.rel (%p388) target = $region60
        $region59: #{tpu_custom_call.1} parent=47 // pred_region
          %391 = dma.done [#allocation6], 512
        $region60: #{tpu_custom_call.1} parent=47 // pred_fallthru
          _
        // Predicated region
        $region61: #{tpu_custom_call.1} parent=47 // pred_check
          %p392 = pneg %p123
        $region62: #{tpu_custom_call.1} parent=47 // pred_check_branch
          %394 = sbr.rel (%p392) target = $region64
        $region63: #{tpu_custom_call.1} parent=47 // pred_region
          %395 = dma.done [#allocation9], 512
        $region64: #{tpu_custom_call.1} parent=47 // pred_fallthru
          _
        %s396 = sand.u32 %s42, 1
        %s397 = scalar_lea.sflag [#allocation3], %s396
        %s398 = sand.u32 %s42, 1
        %s399 = smul.addr %s398, 8
        %s400 = scalar_lea.vmem [#allocation2], %s399
        %p401 = pneg %p55
        %p402 = pneg %p52
        %s403 = sand.u32 %s34, 1
        %s404 = scalar_lea.sflag [#allocation6], %s403
        %s405 = sand.u32 %s68, 1
        %s406 = smul.addr %s405, 8
        %s407 = scalar_lea.vmem [#allocation5], %s406
        %p408 = pneg %p81
        %p409 = pneg %p78
        %p410 = pneg %p102
        %p411 = pneg %p99
        %p412 = pneg %p123
        %p413 = pneg %p120
        %p414 = pneg %p144
        %p415 = pneg %p141
        %p416 = pneg %p165
        %p417 = pneg %p162
        %p418 = scmp.lt.s32.totalorder %s34, 1
        %s419 = scalar_select %p418, %s34, 1
        %s420 = smul.addr %s419, 8
        %s421 = scalar_lea.vmem %s6, %s420
        %p422 = pneg %p191
        %p423 = pneg %p188
        %p424 = pneg %p217
        %p425 = pneg %p214
        %s426 = sand.u32 %s204, 1
        %s427 = scalar_lea.sflag [#allocation4], %s426
        %s428 = sand.u32 %s204, 1
        %s429 = smul.addr %s428, 8
        %s430 = scalar_lea.vmem [#allocation10], %s429
        %p431 = pneg %p243
        %p432 = pneg %p240
        %s433 = sand.u32 %s34, 1
        %s434 = scalar_lea.sflag [#allocation12], %s433
        %s435 = sand.u32 %s230, 1
        %s436 = smul.addr %s435, 8
        %s437 = scalar_lea.vmem [#allocation11], %s436
        %p438 = pneg %p269
        %p439 = pneg %p266
        %s440 = sand.u32 %s34, 1
        %s441 = scalar_lea.sflag [#allocation12], %s440
        %s442 = sand.u32 %s256, 1
        %s443 = scalar_lea.vmem [#allocation13], %s442
        %p444 = scmp.lt.s32.totalorder %s34, 1
        %s445 = scalar_select %p444, %s34, 1
        %s446 = smul.addr %s445, 8
        %s447 = scalar_lea.vmem %s6, %s446
        %v448 = vld [vmem:[%s374] sm:$0xff]
        %v449 = vld [vmem:[#allocation7] sm:$0xff]
        %v450 = vld [vmem:[#allocation7 + $0x8] sm:$0xff]
        %v451 = vld [vmem:[#allocation7 + $0x10] sm:$0xff]
        %v452 = vld [vmem:[#allocation7 + $0x18] sm:$0xff]
        %v453 = vld [vmem:[%s4] sm:$0x1]
        %v455 = vlaneseq
        %v456 = vshrl.u32 %v455, 7
        %v457 = vsub.s32 0, %v456
        %v458 = vrot.slane %v453, %v457
        %vm460 = vcmask 261120
        %v462 = vsel %vm460, %v448, 0
        %464 = vmatprep.subr.mxu0 0.0
        %465 = vmatpush1.msra.mxu0 %v449
        %466 = vmatprep.subr.mxu0 0.0
        %467 = vmatpush1.msra.mxu0 %v450
        %468 = vmatprep.subr.mxu0 0.0
        %469 = vmatpush1.msra.mxu0 %v451
        %470 = vmatprep.subr.mxu0 0.0
        %471 = vmatpush1.msra.mxu0 %v452
        %472 = vmatprep.subr.mxu0 0.0
        %473 = vmatpush1.msra.mxu0 0.0
        %474 = vmatprep.subr.mxu0 0.0
        %475 = vmatpush1.msra.mxu0 0.0
        %476 = vmatprep.subr.mxu0 0.0
        %477 = vmatpush1.msra.mxu0 0.0
        %478 = vmatprep.subr.mxu0 0.0
        %479 = vmatpush1.msra.mxu0 0.0
        %480 = vmatprep.subr.mxu0 0.0
        %481 = vmatpush1.msra.mxu0 0.0
        %482 = vmatprep.subr.mxu0 0.0
        %483 = vmatpush1.msra.mxu0 0.0
        %484 = vmatprep.subr.mxu0 0.0
        %485 = vmatpush1.msra.mxu0 0.0
        %486 = vmatprep.subr.mxu0 0.0
        %487 = vmatpush1.msra.mxu0 0.0
        %488 = vmatprep.subr.mxu0 0.0
        %489 = vmatpush1.msra.mxu0 0.0
        %490 = vmatprep.subr.mxu0 0.0
        %491 = vmatpush1.msra.mxu0 0.0
        %492 = vmatprep.subr.mxu0 0.0
        %493 = vmatpush1.msra.mxu0 0.0
        %494 = vmatprep.subr.mxu0 0.0
        %495 = vmatpush1.msra.mxu0 0.0
        %496 = vmatprep.subr.mxu0 0.0
        %497 = vmatpush1.msra.mxu0 0.0
        %498 = vmatprep.subr.mxu0 0.0
        %499 = vmatpush1.msra.mxu0 0.0
        %500 = vmatprep.subr.mxu0 0.0
        %501 = vmatpush1.msra.mxu0 0.0
        %502 = vmatprep.subr.mxu0 0.0
        %503 = vmatpush1.msra.mxu0 0.0
        %504 = vmatprep.subr.mxu0 0.0
        %505 = vmatpush1.msra.mxu0 0.0
        %506 = vmatprep.subr.mxu0 0.0
        %507 = vmatpush1.msra.mxu0 0.0
        %508 = vmatprep.subr.mxu0 0.0
        %509 = vmatpush1.msra.mxu0 0.0
        %510 = vmatprep.subr.mxu0 0.0
        %511 = vmatpush1.msra.mxu0 0.0
        %512 = vmatprep.subr.mxu0 0.0
        %513 = vmatpush1.msra.mxu0 0.0
        %514 = vmatprep.subr.mxu0 0.0
        %515 = vmatpush1.msra.mxu0 0.0
        %516 = vmatprep.subr.mxu0 0.0
        %517 = vmatpush1.msra.mxu0 0.0
        %518 = vmatprep.subr.mxu0 0.0
        %519 = vmatpush1.msra.mxu0 0.0
        %520 = vmatprep.subr.mxu0 0.0
        %521 = vmatpush1.msra.mxu0 0.0
        %522 = vmatprep.subr.mxu0 0.0
        %523 = vmatpush1.msra.mxu0 0.0
        %524 = vmatprep.subr.mxu0 0.0
        %525 = vmatpush1.msra.mxu0 0.0
        %526 = vmatprep.subr.mxu0 0.0
        %527 = vmatpush1.msra.mxu0 0.0
        %528 = vmatprep.mubr.f32.mxu0 0.0
        %529 = vmatmul.mubr.f32.gmra.mrb[0].mxu0 %v462
        %v530 = vpop.f32.mrb[0].mxu0
        %v531 = vadd.f32 %v458, %v530
        %v532 = vpop.f32.mrb[0].mxu0
        %533 = vdwg.mxu0
        %v534 = vld [vmem:[%s383] sm:$0xff]
        %v535 = vld [vmem:[#allocation8] sm:$0xff]
        %v536 = vld [vmem:[#allocation8 + $0x8] sm:$0xff]
        %v537 = vld [vmem:[#allocation8 + $0x10] sm:$0xff]
        %v538 = vld [vmem:[#allocation8 + $0x18] sm:$0xff]
        %v539 = vld [vmem:[%s5] sm:$0x1]
        %v541 = vlaneseq
        %v542 = vshrl.u32 %v541, 7
        %v543 = vsub.s32 0, %v542
        %v544 = vrot.slane %v539, %v543
        %v547 = vsel %vm460, %v534, 0
        %549 = vmatprep.subr.mxu0 0.0
        %550 = vmatpush1.msra.mxu0 %v535
        %551 = vmatprep.subr.mxu0 0.0
        %552 = vmatpush1.msra.mxu0 %v536
        %553 = vmatprep.subr.mxu0 0.0
        %554 = vmatpush1.msra.mxu0 %v537
        %555 = vmatprep.subr.mxu0 0.0
        %556 = vmatpush1.msra.mxu0 %v538
        %557 = vmatprep.subr.mxu0 0.0
        %558 = vmatpush1.msra.mxu0 0.0
        %559 = vmatprep.subr.mxu0 0.0
        %560 = vmatpush1.msra.mxu0 0.0
        %561 = vmatprep.subr.mxu0 0.0
        %562 = vmatpush1.msra.mxu0 0.0
        %563 = vmatprep.subr.mxu0 0.0
        %564 = vmatpush1.msra.mxu0 0.0
        %565 = vmatprep.subr.mxu0 0.0
        %566 = vmatpush1.msra.mxu0 0.0
        %567 = vmatprep.subr.mxu0 0.0
        %568 = vmatpush1.msra.mxu0 0.0
        %569 = vmatprep.subr.mxu0 0.0
        %570 = vmatpush1.msra.mxu0 0.0
        %571 = vmatprep.subr.mxu0 0.0
        %572 = vmatpush1.msra.mxu0 0.0
        %573 = vmatprep.subr.mxu0 0.0
        %574 = vmatpush1.msra.mxu0 0.0
        %575 = vmatprep.subr.mxu0 0.0
        %576 = vmatpush1.msra.mxu0 0.0
        %577 = vmatprep.subr.mxu0 0.0
        %578 = vmatpush1.msra.mxu0 0.0
        %579 = vmatprep.subr.mxu0 0.0
        %580 = vmatpush1.msra.mxu0 0.0
        %581 = vmatprep.subr.mxu0 0.0
        %582 = vmatpush1.msra.mxu0 0.0
        %583 = vmatprep.subr.mxu0 0.0
        %584 = vmatpush1.msra.mxu0 0.0
        %585 = vmatprep.subr.mxu0 0.0
        %586 = vmatpush1.msra.mxu0 0.0
        %587 = vmatprep.subr.mxu0 0.0
        %588 = vmatpush1.msra.mxu0 0.0
        %589 = vmatprep.subr.mxu0 0.0
        %590 = vmatpush1.msra.mxu0 0.0
        %591 = vmatprep.subr.mxu0 0.0
        %592 = vmatpush1.msra.mxu0 0.0
        %593 = vmatprep.subr.mxu0 0.0
        %594 = vmatpush1.msra.mxu0 0.0
        %595 = vmatprep.subr.mxu0 0.0
        %596 = vmatpush1.msra.mxu0 0.0
        %597 = vmatprep.subr.mxu0 0.0
        %598 = vmatpush1.msra.mxu0 0.0
        %599 = vmatprep.subr.mxu0 0.0
        %600 = vmatpush1.msra.mxu0 0.0
        %601 = vmatprep.subr.mxu0 0.0
        %602 = vmatpush1.msra.mxu0 0.0
        %603 = vmatprep.subr.mxu0 0.0
        %604 = vmatpush1.msra.mxu0 0.0
        %605 = vmatprep.subr.mxu0 0.0
        %606 = vmatpush1.msra.mxu0 0.0
        %607 = vmatprep.subr.mxu0 0.0
        %608 = vmatpush1.msra.mxu0 0.0
        %609 = vmatprep.subr.mxu0 0.0
        %610 = vmatpush1.msra.mxu0 0.0
        %611 = vmatprep.subr.mxu0 0.0
        %612 = vmatpush1.msra.mxu0 0.0
        %613 = vmatprep.mubr.f32.mxu0 0.0
        %614 = vmatmul.mubr.f32.gmra.mrb[0].mxu0 %v547
        %v615 = vpop.f32.mrb[0].mxu0
        %v616 = vadd.f32 %v544, %v615
        %v617 = vpop.f32.mrb[0].mxu0
        %618 = vdwg.mxu0
        %619 = vst [vmem:[%s430] sm:$0xff] %v531
        %620 = vst [vmem:[%s437] sm:$0xff] %v616
        %v621 = vadd.f32 %v531, %v616
        %v622 = vld [vmem:[%s447] sm:$0xff]
        %v623 = vsub.f32 %v621, %v622
        %v624 = vmul.f32 %v623, %v623
        %s625 = smul.u32 %s34, 8
        %v626 = vlaneseq
        %v627 = vshrl.u32 %v626, 7
        %v628 = vstv %s625
        %v629 = vadd.s32 %v628, %v627
        %vm630 = vcmp.lt.s32.totalorder %v629, 12
        %v631 = vsel %vm630, %v624, 0.0
        %v632 = vrot.slane %v631, 4
        %v633 = vadd.f32 %v631, %v632
        %v634 = vrot.slane %v633, 2
        %v635 = vadd.f32 %v633, %v634
        %v636 = vrot.slane %v635, 1
        %v637 = vadd.f32 %v635, %v636
        %638 = vst [vmem:[%s443] sm:$0x1] %v637
        %s639 = sand.u32 %s204, 1
        %s640 = scalar_lea.sflag [#allocation4], %s639
        %s641 = sand.u32 %s204, 1
        %s642 = smul.addr %s641, 8
        %s643 = scalar_lea.vmem [#allocation10], %s642
        %s644 = sand.u32 %s34, 1
        %s645 = scalar_lea.sflag [#allocation12], %s644
        %s646 = sand.u32 %s230, 1
        %s647 = smul.addr %s646, 8
        %s648 = scalar_lea.vmem [#allocation11], %s647
        %s649 = sand.u32 %s34, 1
        %s650 = scalar_lea.sflag [#allocation12], %s649
        %s651 = sand.u32 %s256, 1
        %s652 = scalar_lea.vmem [#allocation13], %s651
        // Predicated region
        $region65: #{tpu_custom_call.1} parent=47 // pred_check
          %p653 = pneg %p214
        $region66: #{tpu_custom_call.1} parent=47 // pred_check_branch
          %655 = sbr.rel (%p653) target = $region68
        $region67: #{tpu_custom_call.1} parent=47 // pred_region
          %s657 = ssub.s32 128, 128
          %658 = vsyncadd %s640, %s657
          %s659 = smul.addr %s34, 128
          %s660 = scalar_lea.hbm %s7, %s659
          %s662 = sshll.u32 %s643, 4
          %s663 = int_to_ptr.vmem [resolvable:$true] %s662
          %665 = dma.vmem_to_hbm [thread:$0]  %s663, 128, %s660, %s640
        $region68: #{tpu_custom_call.1} parent=47 // pred_fallthru
          _
        // Predicated region
        $region69: #{tpu_custom_call.1} parent=47 // pred_check
          %p666 = pneg %p240
        $region70: #{tpu_custom_call.1} parent=47 // pred_check_branch
          %668 = sbr.rel (%p666) target = $region72
        $region71: #{tpu_custom_call.1} parent=47 // pred_region
          %s670 = ssub.s32 128, 128
          %671 = vsyncadd %s645, %s670
          %s672 = smul.addr %s34, 128
          %s673 = scalar_lea.hbm %s8, %s672
          %s675 = sshll.u32 %s648, 4
          %s676 = int_to_ptr.vmem [resolvable:$true] %s675
          %678 = dma.vmem_to_hbm [thread:$0]  %s676, 128, %s673, %s645
        $region72: #{tpu_custom_call.1} parent=47 // pred_fallthru
          _
        // Predicated region
        $region73: #{tpu_custom_call.1} parent=47 // pred_check
          %p679 = pneg %p266
        $region74: #{tpu_custom_call.1} parent=47 // pred_check_branch
          %681 = sbr.rel (%p679) target = $region76
        $region75: #{tpu_custom_call.1} parent=47 // pred_region
          %s683 = ssub.s32 16, 16
          %684 = vsyncadd %s650, %s683
          %s685 = smul.addr %s34, 16
          %s686 = scalar_lea.hbm %s9, %s685
          %s688 = sshll.u32 %s652, 4
          %s689 = int_to_ptr.vmem [resolvable:$true] %s688
          %691 = dma.vmem_to_hbm [thread:$0]  %s689, 16, %s686, %s650
        $region76: #{tpu_custom_call.1} parent=47 // pred_fallthru
          _
      $region48: #{tpu_custom_call.1} parent=5 // pred_fallthru
        _
      %p692 = scmp.le.s32.totalorder 2, %s29
      // Predicated region
      $region77: #{tpu_custom_call.1} parent=5 // pred_check
        %p693 = pneg %p692
      $region78: #{tpu_custom_call.1} parent=5 // pred_check_branch
        %695 = sbr.rel (%p693) target = $region80
      $region79: #{tpu_custom_call.1} parent=5 // pred_region
        %s696 = ssub.s32 %s29, 2
        // Predicated region
        $region81: #{tpu_custom_call.1} parent=79 // pred_check
          %p697 = pneg %p220
        $region82: #{tpu_custom_call.1} parent=79 // pred_check_branch
          %699 = sbr.rel (%p697) target = $region84
        $region83: #{tpu_custom_call.1} parent=79 // pred_region
          %s700 = sand.u32 %s205, 1
          %s701 = scalar_lea.sflag [#allocation4], %s700
          %s702 = sand.u32 %s205, 1
          %s703 = smul.addr %s702, 8
          %s704 = scalar_lea.vmem [#allocation10], %s703
          %705 = dma.done %s701, 128
        $region84: #{tpu_custom_call.1} parent=79 // pred_fallthru
          _
        // Predicated region
        $region85: #{tpu_custom_call.1} parent=79 // pred_check
          %p706 = pneg %p246
        $region86: #{tpu_custom_call.1} parent=79 // pred_check_branch
          %708 = sbr.rel (%p706) target = $region88
        $region87: #{tpu_custom_call.1} parent=79 // pred_region
          %s709 = sand.u32 %s35, 1
          %s710 = scalar_lea.sflag [#allocation12], %s709
          %s711 = sand.u32 %s231, 1
          %s712 = smul.addr %s711, 8
          %s713 = scalar_lea.vmem [#allocation11], %s712
          %714 = dma.done %s710, 128
        $region88: #{tpu_custom_call.1} parent=79 // pred_fallthru
          _
        // Predicated region
        $region89: #{tpu_custom_call.1} parent=79 // pred_check
          %p715 = pneg %p272
        $region90: #{tpu_custom_call.1} parent=79 // pred_check_branch
          %717 = sbr.rel (%p715) target = $region92
        $region91: #{tpu_custom_call.1} parent=79 // pred_region
          %s718 = sand.u32 %s35, 1
          %s719 = scalar_lea.sflag [#allocation12], %s718
          %s720 = sand.u32 %s257, 1
          %s721 = scalar_lea.vmem [#allocation13], %s720
          %722 = dma.done %s719, 16
        $region92: #{tpu_custom_call.1} parent=79 // pred_fallthru
          _
      $region80: #{tpu_custom_call.1} parent=5 // pred_fallthru
        _
    $region6: #{tpu_custom_call.1} parent=1 // loop_footer
      %s33 = sadd.s32 1, %s29
    $region7: #{tpu_custom_call.1} parent=1 // loop_footer_branch
      %28 = sbr.rel target = $region3
    $region8: #{tpu_custom_call.1} parent=1 // loop_exit
      _
    %723 = vsyncpa [#allocation3], 1
    %s724 = scalar_lea.sflag [#allocation3], 1
    %725 = vsyncpa %s724, 1
    %726 = vsyncpa [#allocation6], 1
    %s727 = scalar_lea.sflag [#allocation6], 1
    %728 = vsyncpa %s727, 1
    %729 = vsyncpa [#allocation9], 1
    %730 = vsyncpa [#allocation4], 1
    %s731 = scalar_lea.sflag [#allocation4], 1
    %732 = vsyncpa %s731, 1
    %733 = vsyncpa [#allocation12], 1
    %s734 = scalar_lea.sflag [#allocation12], 1
    %735 = vsyncpa %s734, 1

</llo_original>
